<compile_context>
chip_gen: v5e
topology: v5e:2x2
jax: 0.10.0
libtpu: 0.0.40
codegen_flags: <defaults>
</compile_context>

<pallas_src>
import functools

import jax
import jax.numpy as jnp
from jax.experimental import pallas as pl
from jax.experimental.pallas import tpu as pltpu

_LANES = 128


def _round_up(a, b):
    return -(-a // b) * b


@functools.lru_cache(maxsize=1)
def _num_tensorcores():
    """TensorCores per chip: 2 on megacore (v4/v5p) and v7x, 1 on v5e/v6e."""
    try:
        kind = jax.devices()[0].device_kind.lower()
    except Exception:
        return 1
    if "lite" in kind or "v5e" in kind or "v6" in kind:
        return 1
    if "v7" in kind or "7x" in kind or "v4" in kind or "v5p" in kind:
        return 2
    return 1


def _elem_loss(x, gan_type, target_is_real):
    """Per-element loss term (f32 in, f32 out). Pure jnp: usable in & out of kernel."""
    if gan_type == "LSGAN":
        s = jax.nn.sigmoid(x)
        tgt = 1.0 if target_is_real else 0.0
        return (s - tgt) ** 2
    if gan_type == "vanillaGAN":
        # BCE-with-logits vs all-ones / all-zeros target, numerically stable:
        #   t=1 -> softplus(-x),  t=0 -> softplus(x)
        z = -x if target_is_real else x
        return jnp.maximum(z, 0.0) + jnp.log1p(jnp.exp(-jnp.abs(z)))
    if gan_type == "WGAN_hinge":
        if target_is_real:
            return jnp.maximum(1.0 - x, 0.0)
        return jnp.maximum(x + 1.0, 0.0)
    raise ValueError(gan_type)


def _gan_loss_kernel(x_ref, out_ref, acc_ref, *, gan_type, target_is_real,
                     rows, block_rows, needs_mask):
    """Elementwise loss + masked vector accumulation.

    Grid = (n_splits [parallel], steps [arbitrary/reduction]).
    acc_ref: (block_rows, 128) f32 VMEM scratch, per-split accumulator.
    out_ref: (1, 128) lane-dense partial-sum block per split.
    """
    p = pl.program_id(0)          # core split
    i = pl.program_id(1)          # reduction step within the split
    steps = pl.num_programs(1)
    b = p * steps + i             # logical block index over the row range

    x = x_ref[...].astype(jnp.float32)
    val = _elem_loss(x, gan_type, target_is_real)

    if needs_mask:
        # Covers both (a) the partial final block (rows % block_rows != 0,
        # OOB rows hold undefined data) and (b) phantom duplicate blocks when
        # n_splits * steps > n_blocks (index_map clamps their DMA index, the
        # unclamped `b` here pushes every row past `rows` so they contribute 0).
        r = jax.lax.broadcasted_iota(jnp.int32, val.shape, 0)
        val = jnp.where(b * block_rows + r < rows, val, 0.0)

    @pl.when(i == 0)
    def _():
        acc_ref[...] = val            # write, not zero-init + add

    @pl.when(i > 0)
    def _():
        acc_ref[...] += val

    @pl.when(i == steps - 1)
    def _():
        # One sublane reduce per split -> lane-dense (1, 128) partial sums.
        out_ref[...] = jnp.sum(acc_ref[...], axis=0, keepdims=True)


class GANLossPallas:
    """Pallas equivalent of PTO-yelp GANLoss. Returns a scalar f32 loss."""

    def __init__(self, gan_type):
        if gan_type not in ("LSGAN", "vanillaGAN", "WGAN_hinge"):
            raise ValueError(gan_type)
        self.gan_type = gan_type

    def __call__(self, x, target_is_real, *, block_rows=4096, n_splits=None):
        target_is_real = bool(target_is_real)   # must be a static Python bool
        n = int(x.size)
        flat = jnp.reshape(x, (-1,))            # contiguous flatten: bitcast, free

        rows = n // _LANES
        rem = n - rows * _LANES

        # Ragged tail (< 128 elements): plain JAX in the wrapper, no padding.
        if rem:
            tail = flat[rows * _LANES:].astype(jnp.float32)
            tail_sum = jnp.sum(_elem_loss(tail, self.gan_type, target_is_real))
        else:
            tail_sum = jnp.float32(0.0)

        if rows == 0:
            # Degenerate tiny input (< 128 elements): nothing for the kernel.
            return (tail_sum * jnp.float32(1.0 / n)).astype(jnp.float32)

        if rem:
            # Lane-aligned bulk; the slice feeds a custom call (one copy of the
            # bulk) but the old full-array pad write + padded read are gone.
            x2d = flat[: rows * _LANES].reshape(rows, _LANES)
        else:
            x2d = flat.reshape(rows, _LANES)    # bitcast, zero-copy

        # Tile sizing: large lane-dense tiles; exact row count for small inputs
        # (block dim == full dim needs no sublane rounding and no masking).
        sub = {4: 8, 2: 16, 1: 32}.get(jnp.dtype(x.dtype).itemsize, 8)
        cap = max(sub, _round_up(int(block_rows), sub))
        br = rows if rows <= cap else cap

        n_blocks = -(-rows // br)
        if n_splits is None:
            n_splits = _num_tensorcores()
        n_splits = max(1, min(int(n_splits), n_blocks))
        steps = -(-n_blocks // n_splits)
        has_phantom = n_splits * steps > n_blocks
        needs_mask = (rows % br != 0) or has_phantom

        kernel = functools.partial(
            _gan_loss_kernel,
            gan_type=self.gan_type,
            target_is_real=target_is_real,
            rows=rows,
            block_rows=br,
            needs_mask=needs_mask,
        )

        n_trans = {"LSGAN": 1, "vanillaGAN": 2, "WGAN_hinge": 0}[self.gan_type]
        cost = pl.CostEstimate(
            flops=5 * n,
            transcendentals=n_trans * n,
            bytes_accessed=rows * _LANES * x.dtype.itemsize
            + n_splits * _LANES * 4,
        )

        partials = pl.pallas_call(
            kernel,
            out_shape=jax.ShapeDtypeStruct((1, n_splits * _LANES), jnp.float32),
            grid_spec=pltpu.PrefetchScalarGridSpec(
                num_scalar_prefetch=0,
                grid=(n_splits, steps),
                in_specs=[
                    pl.BlockSpec(
                        (br, _LANES),
                        # Clamp phantom block indices (n_splits*steps > n_blocks)
                        # to the last real block; the kernel masks them to zero.
                        lambda p, i, s=steps, last=n_blocks - 1: (
                            jnp.minimum(p * s + i, last), 0),
                    ),
                ],
                out_specs=pl.BlockSpec((1, _LANES), lambda p, i: (0, p)),
                scratch_shapes=[pltpu.VMEM((br, _LANES), jnp.float32)],
            ),
            compiler_params=pltpu.CompilerParams(
                dimension_semantics=("parallel", "arbitrary"),
            ),
            cost_estimate=cost,
        )(x2d)

        # Final tiny cross-lane sum + tail + mean scale in the wrapper.
        total = jnp.sum(partials) + tail_sum
        return (total * jnp.float32(1.0 / n)).astype(jnp.float32)


def _reference(x, gan_type, target_is_real):
    x = x.astype(jnp.float32)
    if gan_type == "LSGAN":
        t = 1.0 if target_is_real else 0.0
        return jnp.mean((jax.nn.sigmoid(x) - t) ** 2)
    if gan_type == "vanillaGAN":
        z = -x if target_is_real else x
        return jnp.mean(jnp.maximum(z, 0.0) + jnp.log1p(jnp.exp(-jnp.abs(z))))
    if gan_type == "WGAN_hinge":
        if target_is_real:
            return jnp.mean(jnp.maximum(1.0 - x, 0.0))
        return jnp.mean(jnp.maximum(x + 1.0, 0.0))
    raise ValueError(gan_type)


if __name__ == "__main__":
    key = jax.random.PRNGKey(0)

    # Discriminator-output-like tensors:
    #   (2,4,16,16) = 2048 elems : lane-aligned -> zero-copy bitcast path
    #   (2,3,17,19) = 1938 elems : ragged -> kernel bulk + plain-JAX tail (<128)
    test_shapes = [(2, 4, 16, 16), (2, 3, 17, 19)]
    xs = []
    for shp in test_shapes:
        key, sub = jax.random.split(key)
        xs.append(jax.random.normal(sub, shp, dtype=jnp.float32))

    for gan_type in ("LSGAN", "vanillaGAN", "WGAN_hinge"):
        loss_mod = GANLossPallas(gan_type)
        for x in xs:
            for target_is_real in (True, False):
                got = jax.block_until_ready(loss_mod(x, target_is_real))
                want = _reference(x, gan_type, target_is_real)
                assert jnp.allclose(got, want, atol=1e-5, rtol=1e-5), (
                    gan_type, x.shape, target_is_real, float(got), float(want))

    # Multi-block + forced 2-way split: exercises the partial-final-block row
    # mask AND the phantom duplicate-block path (rows=39, br=16, 3 blocks).
    key, sub = jax.random.split(key)
    x3 = jax.random.normal(sub, (3, 13, 128), dtype=jnp.float32)
    loss_mod = GANLossPallas("LSGAN")
    got = jax.block_until_ready(loss_mod(x3, True, block_rows=16, n_splits=2))
    want = _reference(x3, "LSGAN", True)
    assert jnp.allclose(got, want, atol=1e-5, rtol=1e-5), (float(got), float(want))

    # Small multi-block path with the hardware-derived split count.
    got = jax.block_until_ready(loss_mod(xs[0], True, block_rows=8))
    want = _reference(xs[0], "LSGAN", True)
    assert jnp.allclose(got, want, atol=1e-5, rtol=1e-5), (float(got), float(want))

    print("KERNEL_OK")
</pallas_src>

<mosaic_0001>
module attributes {stable_mosaic.version = 11 : i64} {
  func.func @_gan_loss_kernel(%arg0: i32, %arg1: i32, %arg2: memref<16x128xf32, #tpu.memory_space<vmem>>, %arg3: memref<1x128xf32, #tpu.memory_space<vmem>>, %arg4: memref<16x128xf32, #tpu.memory_space<vmem>>) attributes {dimension_semantics = [#tpu.dimension_semantics<parallel>, #tpu.dimension_semantics<arbitrary>], iteration_bounds = array<i64: 1, 1>, scalar_prefetch = 0 : i64, scratch_operands = 1 : i64, tpu.core_type = #tpu.core_type<tc>, window_params = [{transform_indices = @transform_0, window_bounds = array<i64: 16, 128>}, {transform_indices = @transform_1, window_bounds = array<i64: 1, 128>}]} {
    %c0 = arith.constant 0 : index
    %c0_0 = arith.constant 0 : index
    %0 = vector.load %arg2[%c0, %c0_0] : memref<16x128xf32, #tpu.memory_space<vmem>>, vector<16x128xf32>
    %1 = arith.negf %0 : vector<16x128xf32>
    %2 = math.exp %1 : vector<16x128xf32>
    %cst = arith.constant 1.000000e+00 : f32
    %3 = vector.broadcast %cst : f32 to vector<16x128xf32>
    %4 = arith.addf %3, %2 : vector<16x128xf32>
    %5 = arith.divf %3, %4 : vector<16x128xf32>
    %cst_1 = arith.constant 1.000000e+00 : f32
    %6 = vector.broadcast %cst_1 : f32 to vector<16x128xf32>
    %7 = arith.subf %5, %6 : vector<16x128xf32>
    %8 = arith.mulf %7, %7 : vector<16x128xf32>
    %c0_i32 = arith.constant 0 : i32
    %9 = arith.cmpi eq, %arg1, %c0_i32 : i32
    %10 = arith.extui %9 : i1 to i32
    %c0_i32_2 = arith.constant 0 : i32
    %11 = arith.cmpi ne, %10, %c0_i32_2 : i32
    scf.if %11 {
      %c0_7 = arith.constant 0 : index
      %c0_8 = arith.constant 0 : index
      %18 = vector.load %arg4[%c0_7, %c0_8] : memref<16x128xf32, #tpu.memory_space<vmem>>, vector<16x128xf32>
      tpu.vector_store %arg4[%c0_7, %c0_8], %8 {strides = array<i32>} : memref<16x128xf32, #tpu.memory_space<vmem>>, vector<16x128xf32>,
    } else {
    }
    %c0_i32_3 = arith.constant 0 : i32
    %12 = arith.cmpi sgt, %arg1, %c0_i32_3 : i32
    %13 = arith.extui %12 : i1 to i32
    %c0_i32_4 = arith.constant 0 : i32
    %14 = arith.cmpi ne, %13, %c0_i32_4 : i32
    scf.if %14 {
      %c0_7 = arith.constant 0 : index
      %c0_8 = arith.constant 0 : index
      %18 = vector.load %arg4[%c0_7, %c0_8] : memref<16x128xf32, #tpu.memory_space<vmem>>, vector<16x128xf32>
      %19 = arith.addf %18, %8 : vector<16x128xf32>
      %c0_9 = arith.constant 0 : index
      %c0_10 = arith.constant 0 : index
      %20 = vector.load %arg4[%c0_9, %c0_10] : memref<16x128xf32, #tpu.memory_space<vmem>>, vector<16x128xf32>
      tpu.vector_store %arg4[%c0_9, %c0_10], %19 {strides = array<i32>} : memref<16x128xf32, #tpu.memory_space<vmem>>, vector<16x128xf32>,
    } else {
    }
    %c0_i32_5 = arith.constant 0 : i32
    %15 = arith.cmpi eq, %arg1, %c0_i32_5 : i32
    %16 = arith.extui %15 : i1 to i32
    %c0_i32_6 = arith.constant 0 : i32
    %17 = arith.cmpi ne, %16, %c0_i32_6 : i32
    scf.if %17 {
      %c0_7 = arith.constant 0 : index
      %c0_8 = arith.constant 0 : index
      %18 = vector.load %arg4[%c0_7, %c0_8] : memref<16x128xf32, #tpu.memory_space<vmem>>, vector<16x128xf32>
      %cst_9 = arith.constant dense<0.000000e+00> : vector<128xf32>
      %19 = vector.multi_reduction <add>, %18, %cst_9 [0] : vector<16x128xf32> to vector<128xf32>
      %20 = vector.shape_cast %19 : vector<128xf32> to vector<1x128xf32>
      %c0_10 = arith.constant 0 : index
      %c0_11 = arith.constant 0 : index
      %21 = vector.load %arg3[%c0_10, %c0_11] : memref<1x128xf32, #tpu.memory_space<vmem>>, vector<1x128xf32>
      tpu.vector_store %arg3[%c0_10, %c0_11], %20 {strides = array<i32>} : memref<1x128xf32, #tpu.memory_space<vmem>>, vector<1x128xf32>,
    } else {
    }
    return
  }
  func.func @transform_0(%arg0: i32, %arg1: i32) -> (i32, i32) {
    %c1_i32 = arith.constant 1 : i32
    %0 = arith.muli %arg0, %c1_i32 : i32
    %1 = arith.addi %0, %arg1 : i32
    %c0_i32 = arith.constant 0 : i32
    %2 = arith.minsi %1, %c0_i32 : i32
    %c0_i32_0 = arith.constant 0 : i32
    %c0_i32_1 = arith.constant 0 : i32
    return %2, %c0_i32_0 : i32, i32
  }
  func.func @transform_1(%arg0: i32, %arg1: i32) -> (i32, i32) {
    %c0_i32 = arith.constant 0 : i32
    %c0_i32_0 = arith.constant 0 : i32
    return %c0_i32, %arg0 : i32, i32
  }
}

</mosaic_0001>

<llo_original>
// kernel: tpu_custom_call.1
$region0: #{tpu_custom_call.1}
  #allocation0 [shape = 'u32[]', space=smem, size = 0x4, offset = 0x4, fixed_abs, tag = 'smem constant byte address 0x4 - core index']
  #allocation1 [shape = 'u32[72,128]{1,0:T(1,128)}', space=vmem, size = 0x9000, scoped, tag = 'internal scratch']
  #allocation2 [shape = 'f32[16,128]{1,0:T(8,128)}', space=vmem, size = 0x2000, scoped, tag = 'scratch operand']
  %s0 = inlined_call_operand.hbm [shape: f32[16,128], index: 0, kind: input, shape index: {}]
  %s1 = inlined_call_operand.hbm [shape: f32[1,128], index: 1, kind: output, shape index: {}]
  %s2 = sld [smem:[#allocation0]]
  $region30: #{tpu_custom_call.1} parent=0
    _
  %s4 = ssub.s32 1, %s2
  %s5 = scalar_select 0, %s4, %s2
  $region1: #{tpu_custom_call.1} parent=0
    #allocation3 [shape = 'u8[8192]{0}', space=vmem, size = 0x2000, scoped, tag = 'input window, operand 0, single buffered']
    #allocation4 [shape = 's32[1]{0}', space=sflag, size = 0x4, scoped, tag = 'scoped memory for tpu_custom_call.1']
    #allocation5 [shape = 's32[1]{0}', space=sflag, size = 0x4, scoped, tag = 'scoped memory for tpu_custom_call.1']
    #allocation6 [shape = 'u8[512]{0}', space=vmem, size = 0x400, scoped, tag = 'output window, operand 0, single buffered']
    %6 = vsyncpa [#allocation4], 0
    %7 = vsyncpa [#allocation5], 0
    // Predicated region
    $region2: #{tpu_custom_call.1} parent=1 // pred_check
      _
    $region3: #{tpu_custom_call.1} parent=1 // pred_check_branch
      %9 = sbr.rel (0) target = $region5
    $region4: #{tpu_custom_call.1} parent=1 // pred_region
      %s10 = sadd.s32 0, 0
      %p11 = scmp.lt.s32.totalorder %s10, 0
      %s12 = scalar_select %p11, %s10, 0
      %s13 = smul.u32 2, %s12
      %15 = vsyncadd [#allocation4], 0
      %s16 = smul.addr %s13, 8
      %s17 = scalar_lea.hbm %s0, %s16
      %s18 = sshll.u32 %s17, 4
      %s19 = int_to_ptr.hbm [resolvable:$true] %s18
      %s20 = sshll.u32 [#allocation3], 4
      %s21 = int_to_ptr.vmem [resolvable:$true] %s20
      %26 = dma.hbm_to_vmem [thread:$0]  %s19, 256, %s21, [#allocation4], 128, 128, 8
    $region5: #{tpu_custom_call.1} parent=1 // pred_fallthru
      _
    // Predicated region
    $region6: #{tpu_custom_call.1} parent=1 // pred_check
      _
    $region7: #{tpu_custom_call.1} parent=1 // pred_check_branch
      %28 = sbr.rel (0) target = $region9
    $region8: #{tpu_custom_call.1} parent=1 // pred_region
      %30 = dma.done [#allocation4], 256
    $region9: #{tpu_custom_call.1} parent=1 // pred_fallthru
      _
    %s31 = sadd.s32 0, 0
    %p32 = scmp.lt.s32.totalorder %s31, 0
    %s33 = scalar_select %p32, %s31, 0
    %s34 = smul.u32 2, %s33
    %v35 = vld [vmem:[#allocation3] sm:$0xff]
    %v36 = vld [vmem:[#allocation3 + $0x8] sm:$0xff]
    %v37 = vxor.u32 %v35, 2147483648
    %v38 = vxor.u32 %v36, 2147483648
    %v39 = vmul.f32 %v37, 1.442695
    %v40 = vpow.pop %v39
    %v41 = vmul.f32 %v38, 1.442695
    %v42 = vpow.pop %v41
    %v43 = vadd.f32 %v40, 1.0
    %v44 = vadd.f32 %v42, 1.0
    %v45 = vrcp.pop %v43
    %v46 = vmul.f32 %v43, %v45
    %v47 = vsub.f32 1.0, %v46
    %v48 = vmul.f32 %v45, %v47
    %v49 = vadd.f32 %v45, %v48
    %vm50 = vweird.f32 %v43
    %vm51 = vweird.f32 %v45
    %vm52 = vmor %vm50, %vm51
    %v53 = vsel %vm52, %v45, %v49
    %v54 = vand.u32 2147483647, %v43
    %vm55 = vcmp.eq.f32.partialorder %v54, 8.507059e+37
    %v56 = vand.u32 %v43, 2147483648
    %v57 = vor.u32 1.1754944e-38, %v56
    %v58 = vsel %vm55, %v57, %v53
    %v59 = vmul.f32 1.0, %v58
    %v60 = vrcp.pop %v44
    %v61 = vmul.f32 %v44, %v60
    %v62 = vsub.f32 1.0, %v61
    %v63 = vmul.f32 %v60, %v62
    %v64 = vadd.f32 %v60, %v63
    %vm65 = vweird.f32 %v44
    %vm66 = vweird.f32 %v60
    %vm67 = vmor %vm65, %vm66
    %v68 = vsel %vm67, %v60, %v64
    %v69 = vand.u32 2147483647, %v44
    %vm70 = vcmp.eq.f32.partialorder %v69, 8.507059e+37
    %v71 = vand.u32 %v44, 2147483648
    %v72 = vor.u32 1.1754944e-38, %v71
    %v73 = vsel %vm70, %v72, %v68
    %v74 = vmul.f32 1.0, %v73
    %v75 = vsub.f32 %v59, 1.0
    %v76 = vsub.f32 %v74, 1.0
    %v77 = vmul.f32 %v75, %v75
    %v78 = vmul.f32 %v76, %v76
    %p79 = scmp.eq.s32.totalorder 0, 0
    // Predicated region
    $region10: #{tpu_custom_call.1} parent=1 // pred_check
      %p80 = pneg %p79
    $region11: #{tpu_custom_call.1} parent=1 // pred_check_branch
      %82 = sbr.rel (%p80) target = $region13
    $region12: #{tpu_custom_call.1} parent=1 // pred_region
      %83 = vst [vmem:[#allocation2] sm:$0xff] %v77
      %84 = vst [vmem:[#allocation2 + $0x8] sm:$0xff] %v78
    $region13: #{tpu_custom_call.1} parent=1 // pred_fallthru
      _
    %p85 = scmp.gt.s32.totalorder 0, 0
    // Predicated region
    $region14: #{tpu_custom_call.1} parent=1 // pred_check
      %p86 = pneg %p85
    $region15: #{tpu_custom_call.1} parent=1 // pred_check_branch
      %88 = sbr.rel (%p86) target = $region17
    $region16: #{tpu_custom_call.1} parent=1 // pred_region
      %v89 = vld [vmem:[#allocation2] sm:$0xff]
      %v90 = vld [vmem:[#allocation2 + $0x8] sm:$0xff]
      %v91 = vadd.f32 %v89, %v77
      %v92 = vadd.f32 %v90, %v78
      %93 = vst [vmem:[#allocation2] sm:$0xff] %v91
      %94 = vst [vmem:[#allocation2 + $0x8] sm:$0xff] %v92
    $region17: #{tpu_custom_call.1} parent=1 // pred_fallthru
      _
    // Predicated region
    $region18: #{tpu_custom_call.1} parent=1 // pred_check
      %p95 = pneg %p79
    $region19: #{tpu_custom_call.1} parent=1 // pred_check_branch
      %97 = sbr.rel (%p95) target = $region21
    $region20: #{tpu_custom_call.1} parent=1 // pred_region
      %v98 = vld [vmem:[#allocation2] sm:$0xff]
      %v99 = vld [vmem:[#allocation2 + $0x8] sm:$0xff]
      %v100 = vadd.f32 %v98, %v99
      %v101 = vrot.slane %v100, 4
      %v102 = vadd.f32 %v100, %v101
      %v103 = vrot.slane %v102, 2
      %v104 = vadd.f32 %v102, %v103
      %v105 = vrot.slane %v104, 1
      %v106 = vadd.f32 %v104, %v105
      %107 = vst [vmem:[#allocation6] sm:$0x1] %v106
    $region21: #{tpu_custom_call.1} parent=1 // pred_fallthru
      _
    // Predicated region
    $region22: #{tpu_custom_call.1} parent=1 // pred_check
      _
    $region23: #{tpu_custom_call.1} parent=1 // pred_check_branch
      %109 = sbr.rel (0) target = $region25
    $region24: #{tpu_custom_call.1} parent=1 // pred_region
      %111 = vsyncadd [#allocation5], 0
      %s113 = sshll.u32 [#allocation6], 4
      %s114 = int_to_ptr.vmem [resolvable:$true] %s113
      %s115 = sshll.u32 %s1, 4
      %s116 = int_to_ptr.hbm [resolvable:$true] %s115
      %118 = dma.vmem_to_hbm [thread:$0]  %s114, 16, %s116, [#allocation5]
    $region25: #{tpu_custom_call.1} parent=1 // pred_fallthru
      _
    // Predicated region
    $region26: #{tpu_custom_call.1} parent=1 // pred_check
      _
    $region27: #{tpu_custom_call.1} parent=1 // pred_check_branch
      %120 = sbr.rel (0) target = $region29
    $region28: #{tpu_custom_call.1} parent=1 // pred_region
      %122 = dma.done [#allocation5], 16
    $region29: #{tpu_custom_call.1} parent=1 // pred_fallthru
      _
    %123 = vsyncpa [#allocation4], 1
    %124 = vsyncpa [#allocation5], 1

</llo_original>
